<compile_context>
chip_gen: v7x
topology: tpu7x:2x2x1
jax: 0.10.0
libtpu: 0.0.40
codegen_flags: <defaults>
</compile_context>

<pallas_src>
import jax
import jax.numpy as jnp
from jax.experimental import pallas as pl
from jax.experimental.pallas import tpu as pltpu

CONV1_K = 3  # kernel_size of the first conv (fixed by the module)


def _round_up(n, m):
    return ((n + m - 1) // m) * m


def cnn_encoder_kernel(x_ref, w1_ref, b1_ref, w2_ref, b2_ref, out_ref):
    """Two back-to-back MXU matmuls + f32 bias/ReLU; no in-kernel relayouts."""
    # x_ref  : [TB, (L+2)*Cin]   zero-padded, time-flattened input tile
    # w1_ref : [(L+2)*Cin, L*H]  banded (Toeplitz) conv1 weight
    # b1_ref : [1, L*H]          f32 (conv1 bias tiled L times)
    # w2_ref : [L*H, Npad]       conv2 weight, tap-major, N zero-padded to 128
    # b2_ref : [1, Npad]         f32
    # out_ref: [TB, Npad]        f32
    h = jnp.dot(x_ref[...], w1_ref[...], preferred_element_type=jnp.float32)
    h = jnp.maximum(h + b1_ref[...], 0.0)          # conv1 bias + ReLU (f32)
    h = h.astype(w2_ref.dtype)                     # already in (TB, L*H) lanes
    o = jnp.dot(h, w2_ref[...], preferred_element_type=jnp.float32)
    o = jnp.maximum(o + b2_ref[...], 0.0)          # conv2 bias + ReLU (f32)
    out_ref[...] = o.astype(out_ref.dtype)


def cnn_encoder_forward(x, w1, b1, w2, b2, *, block_b=2048,
                        compute_dtype=jnp.float32):
    """x : [B, L, Cin]  (== torch input [batch, history_length, input_dim]).

    w1: [H, Cin, 3]  (torch Conv1d weight)   b1: [H]
    w2: [H, H, L]    (torch Conv1d weight)   b2: [H]
    compute_dtype: dtype fed to the MXU (jnp.float32 or jnp.bfloat16; bf16 is
                   fine on v5e/v6e/v7x since bias/ReLU/accum stay f32).
    Returns [B, H] float32.
    """
    B, L, Cin = x.shape
    H = w1.shape[0]
    assert w1.shape == (H, Cin, CONV1_K)
    assert w2.shape == (H, H, L)

    K1 = (L + 2) * Cin                      # banded conv1 contraction depth
    N1 = L * H                              # conv1 out width == conv2 K
    Npad = max(128, _round_up(H, 128))      # lane-dense output width

    # Batch tile: multiple of 8, capped so the grid has >= 2 steps whenever
    # possible (megacore sharding on v7x); large tiles amortize per-step cost.
    tb = _round_up(max(8, min(block_b, pl.cdiv(B, 2))), 8)
    Bp = _round_up(B, tb)

    # ---- wrapper-side layout plumbing (traced once, fuses into HBM copies) --
    # Zero-pad batch -> Bp and time by 1 each side (conv1 pad=1), then flatten
    # time/channel:  x2[b, t*Cin + c] = xpad[b, t, c]        -> [Bp, (L+2)*Cin]
    xpad = jnp.pad(x, ((0, Bp - B), (1, 1), (0, 0)))
    x2 = xpad.reshape(Bp, K1).astype(compute_dtype)

    # Banded conv1 weight: band[(t+dk)*Cin + c, t*H + o] = w1[o, c, dk].
    w1_tap = jnp.transpose(w1, (2, 1, 0)).reshape(CONV1_K * Cin, H)
    w1_band = jnp.zeros((K1, N1), dtype=jnp.float32)
    for t in range(L):
        w1_band = w1_band.at[t * Cin:(t + CONV1_K) * Cin,
                             t * H:(t + 1) * H].set(w1_tap)
    w1_band = w1_band.astype(compute_dtype)
    b1_tiled = jnp.tile(b1, L).reshape(1, N1).astype(jnp.float32)

    # Conv2: tap-major flatten, then zero-pad N to 128 for unmasked stores.
    w2_flat = jnp.transpose(w2, (2, 1, 0)).reshape(N1, H)
    w2_pad = jnp.pad(w2_flat, ((0, 0), (0, Npad - H))).astype(compute_dtype)
    b2_pad = jnp.pad(b2, (0, Npad - H)).reshape(1, Npad).astype(jnp.float32)

    grid_spec = pl.GridSpec(
        grid=(Bp // tb,),
        in_specs=[
            pl.BlockSpec((tb, K1), lambda i: (i, 0)),     # batch-tiled input
            pl.BlockSpec((K1, N1), lambda i: (0, 0)),     # resident weights
            pl.BlockSpec((1, N1), lambda i: (0, 0)),
            pl.BlockSpec((N1, Npad), lambda i: (0, 0)),
            pl.BlockSpec((1, Npad), lambda i: (0, 0)),
        ],
        out_specs=pl.BlockSpec((tb, Npad), lambda i: (i, 0)),
    )

    itm = jnp.dtype(compute_dtype).itemsize
    cost = pl.CostEstimate(
        flops=2 * Bp * (K1 * N1 + N1 * Npad),
        transcendentals=0,
        bytes_accessed=(Bp * K1 * itm + K1 * N1 * itm + N1 * Npad * itm
                        + 4 * (N1 + Npad) + Bp * Npad * 4),
    )

    out = pl.pallas_call(
        cnn_encoder_kernel,
        out_shape=jax.ShapeDtypeStruct((Bp, Npad), jnp.float32),
        grid_spec=grid_spec,
        compiler_params=pltpu.CompilerParams(
            dimension_semantics=("parallel",)),           # megacore on v7x
        cost_estimate=cost,
    )(x2, w1_band, b1_tiled, w2_pad, b2_pad)

    return out[:B, :H]


def ref_forward(x, w1, b1, w2, b2):
    """Pure-JAX reference mirroring the PyTorch forward exactly."""
    xt = jnp.transpose(x, (0, 2, 1))                              # permute(0,2,1) -> NCW
    dn1 = jax.lax.conv_dimension_numbers(xt.shape, w1.shape, ('NCH', 'OIH', 'NCH'))
    h = jax.lax.conv_general_dilated(xt, w1, (1,), [(1, 1)], dimension_numbers=dn1)
    h = jax.nn.relu(h + b1[None, :, None])
    dn2 = jax.lax.conv_dimension_numbers(h.shape, w2.shape, ('NCH', 'OIH', 'NCH'))
    o = jax.lax.conv_general_dilated(h, w2, (1,), [(0, 0)], dimension_numbers=dn2)
    o = jax.nn.relu(o + b2[None, :, None])
    return o[:, :, 0]                                             # squeeze(-1)


if __name__ == "__main__":
    # Small shapes consistent with the module:
    #   batch=50, history_length=8, input_dim=16, hidden_size=32, num_layers=2
    # block_b=16 so the demo exercises a multi-step grid (4 steps) + batch pad.
    B, L, Cin, H = 50, 8, 16, 32

    key = jax.random.PRNGKey(0)
    kx, k1, k2, k3, k4 = jax.random.split(key, 5)

    x = jax.random.normal(kx, (B, L, Cin), dtype=jnp.float32)
    # Deterministic synthetic parameters (torch Conv1d weight shapes).
    w1 = jax.random.normal(k1, (H, Cin, CONV1_K), dtype=jnp.float32) * 0.1
    b1 = jax.random.normal(k2, (H,), dtype=jnp.float32) * 0.1
    w2 = jax.random.normal(k3, (H, H, L), dtype=jnp.float32) * 0.1
    b2 = jax.random.normal(k4, (H,), dtype=jnp.float32) * 0.1

    ref = ref_forward(x, w1, b1, w2, b2)

    # f32 compute path: faithful to the (f32) torch module.
    out_f32 = jax.block_until_ready(
        cnn_encoder_forward(x, w1, b1, w2, b2, block_b=16,
                            compute_dtype=jnp.float32))
    assert out_f32.shape == (B, H), out_f32.shape
    assert jnp.allclose(out_f32, ref, atol=1e-4, rtol=1e-4), (
        float(jnp.max(jnp.abs(out_f32 - ref))))

    # bf16 MXU-input path (perf config on all generations): looser tolerance.
    out_bf16 = jax.block_until_ready(
        cnn_encoder_forward(x, w1, b1, w2, b2, block_b=16,
                            compute_dtype=jnp.bfloat16))
    assert out_bf16.shape == (B, H), out_bf16.shape
    assert jnp.allclose(out_bf16, ref, atol=5e-2, rtol=5e-2), (
        float(jnp.max(jnp.abs(out_bf16 - ref))))

    print("KERNEL_OK")
</pallas_src>

<mosaic_0001>
module attributes {stable_mosaic.version = 11 : i64} {
  func.func @cnn_encoder_kernel(%arg0: i32, %arg1: memref<16x160xf32, #tpu.memory_space<vmem>>, %arg2: memref<160x256xf32, #tpu.memory_space<vmem>>, %arg3: memref<1x256xf32, #tpu.memory_space<vmem>>, %arg4: memref<256x128xf32, #tpu.memory_space<vmem>>, %arg5: memref<1x128xf32, #tpu.memory_space<vmem>>, %arg6: memref<16x128xf32, #tpu.memory_space<vmem>>) attributes {dimension_semantics = [#tpu.dimension_semantics<parallel>], iteration_bounds = array<i64: 4>, scalar_prefetch = 0 : i64, scratch_operands = 0 : i64, tpu.core_type = #tpu.core_type<tc>, window_params = [{transform_indices = @transform_0, window_bounds = array<i64: 16, 160>}, {pipeline_mode = #tpu.pipeline_mode<synchronous>, transform_indices = @transform_1, window_bounds = array<i64: 160, 256>}, {pipeline_mode = #tpu.pipeline_mode<synchronous>, transform_indices = @transform_2, window_bounds = array<i64: 1, 256>}, {pipeline_mode = #tpu.pipeline_mode<synchronous>, transform_indices = @transform_3, window_bounds = array<i64: 256, 128>}, {pipeline_mode = #tpu.pipeline_mode<synchronous>, transform_indices = @transform_4, window_bounds = array<i64: 1, 128>}, {transform_indices = @transform_5, window_bounds = array<i64: 16, 128>}]} {
    %c0 = arith.constant 0 : index
    %c0_0 = arith.constant 0 : index
    %0 = vector.load %arg1[%c0, %c0_0] : memref<16x160xf32, #tpu.memory_space<vmem>>, vector<16x160xf32>
    %c0_1 = arith.constant 0 : index
    %c0_2 = arith.constant 0 : index
    %1 = vector.load %arg2[%c0_1, %c0_2] : memref<160x256xf32, #tpu.memory_space<vmem>>, vector<160x256xf32>
    %cst = arith.constant dense<0.000000e+00> : vector<16x256xf32>
    %2 = tpu.matmul %0, %1, %cst {dimension_numbers = #tpu.dot_dimension_numbers<[1], [0], [0], [1], [0, 0, 1, 1], [], []>} : vector<16x160xf32>, vector<160x256xf32>, vector<16x256xf32> -> vector<16x256xf32>
    %c0_3 = arith.constant 0 : index
    %c0_4 = arith.constant 0 : index
    %3 = vector.load %arg3[%c0_3, %c0_4] : memref<1x256xf32, #tpu.memory_space<vmem>>, vector<1x256xf32>
    %4 = vector.broadcast %3 : vector<1x256xf32> to vector<16x256xf32>
    %5 = arith.addf %2, %4 : vector<16x256xf32>
    %cst_5 = arith.constant 0.000000e+00 : f32
    %6 = vector.broadcast %cst_5 : f32 to vector<16x256xf32>
    %7 = arith.maximumf %5, %6 : vector<16x256xf32>
    %c0_6 = arith.constant 0 : index
    %c0_7 = arith.constant 0 : index
    %8 = vector.load %arg4[%c0_6, %c0_7] : memref<256x128xf32, #tpu.memory_space<vmem>>, vector<256x128xf32>
    %cst_8 = arith.constant dense<0.000000e+00> : vector<16x128xf32>
    %9 = tpu.matmul %7, %8, %cst_8 {dimension_numbers = #tpu.dot_dimension_numbers<[1], [0], [0], [1], [0, 0, 1, 1], [], []>} : vector<16x256xf32>, vector<256x128xf32>, vector<16x128xf32> -> vector<16x128xf32>
    %c0_9 = arith.constant 0 : index
    %c0_10 = arith.constant 0 : index
    %10 = vector.load %arg5[%c0_9, %c0_10] : memref<1x128xf32, #tpu.memory_space<vmem>>, vector<1x128xf32>
    %11 = vector.broadcast %10 : vector<1x128xf32> to vector<16x128xf32>
    %12 = arith.addf %9, %11 : vector<16x128xf32>
    %cst_11 = arith.constant 0.000000e+00 : f32
    %13 = vector.broadcast %cst_11 : f32 to vector<16x128xf32>
    %14 = arith.maximumf %12, %13 : vector<16x128xf32>
    %c0_12 = arith.constant 0 : index
    %c0_13 = arith.constant 0 : index
    %15 = vector.load %arg6[%c0_12, %c0_13] : memref<16x128xf32, #tpu.memory_space<vmem>>, vector<16x128xf32>
    tpu.vector_store %arg6[%c0_12, %c0_13], %14 {strides = array<i32>} : memref<16x128xf32, #tpu.memory_space<vmem>>, vector<16x128xf32>,
    return
  }
  func.func @transform_0(%arg0: i32) -> (i32, i32) {
    %c0_i32 = arith.constant 0 : i32
    %c0_i32_0 = arith.constant 0 : i32
    return %arg0, %c0_i32 : i32, i32
  }
  func.func @transform_1(%arg0: i32) -> (i32, i32) {
    %c0_i32 = arith.constant 0 : i32
    %c0_i32_0 = arith.constant 0 : i32
    %c0_i32_1 = arith.constant 0 : i32
    return %c0_i32, %c0_i32_0 : i32, i32
  }
  func.func @transform_2(%arg0: i32) -> (i32, i32) {
    %c0_i32 = arith.constant 0 : i32
    %c0_i32_0 = arith.constant 0 : i32
    %c0_i32_1 = arith.constant 0 : i32
    return %c0_i32, %c0_i32_0 : i32, i32
  }
  func.func @transform_3(%arg0: i32) -> (i32, i32) {
    %c0_i32 = arith.constant 0 : i32
    %c0_i32_0 = arith.constant 0 : i32
    %c0_i32_1 = arith.constant 0 : i32
    return %c0_i32, %c0_i32_0 : i32, i32
  }
  func.func @transform_4(%arg0: i32) -> (i32, i32) {
    %c0_i32 = arith.constant 0 : i32
    %c0_i32_0 = arith.constant 0 : i32
    %c0_i32_1 = arith.constant 0 : i32
    return %c0_i32, %c0_i32_0 : i32, i32
  }
  func.func @transform_5(%arg0: i32) -> (i32, i32) {
    %c0_i32 = arith.constant 0 : i32
    %c0_i32_0 = arith.constant 0 : i32
    return %arg0, %c0_i32 : i32, i32
  }
}

</mosaic_0001>

<llo_original>
// kernel: tpu_custom_call.1
$region0: #{tpu_custom_call.1}
  #allocation0 [shape = 'u32[]', space=smem, size = 0x4, offset = 0x4, fixed_abs, tag = 'smem constant byte address 0x4 - core index']
  #allocation1 [shape = 'u32[144,128]{1,0:T(1,128)}', space=vmem, size = 0x12000, scoped, tag = 'internal scratch']
  %s0 = inlined_call_operand.hbm [shape: f32[64,160], index: 0, kind: input, shape index: {}]
  %s1 = inlined_call_operand.hbm [shape: f32[160,256], index: 1, kind: input, shape index: {}]
  %s2 = inlined_call_operand.vmem [shape: f32[1,256], index: 2, kind: input, shape index: {}]
  %s3 = inlined_call_operand.hbm [shape: f32[256,128], index: 3, kind: input, shape index: {}]
  %s4 = inlined_call_operand.vmem [shape: f32[1,128], index: 4, kind: input, shape index: {}]
  %s5 = inlined_call_operand.hbm [shape: f32[64,128], index: 5, kind: output, shape index: {}]
  %s6 = sld [smem:[#allocation0]]
  $region65: #{tpu_custom_call.1} parent=0
    _
  %s8 = ssub.s32 1, %s6
  %s9 = scalar_select 0, %s8, %s6
  $region1: #{tpu_custom_call.1} parent=0
    #allocation2 [shape = 'u8[32768]{0}', space=vmem, size = 0x8000, scoped, tag = 'input window, operand 0']
    #allocation3 [shape = 's32[2]{0}', space=sflag, size = 0x8, scoped, tag = 'scoped memory for tpu_custom_call.1']
    #allocation4 [shape = 's32[2]{0}', space=sflag, size = 0x8, scoped, tag = 'scoped memory for tpu_custom_call.1']
    #allocation5 [shape = 'u8[163840]{0}', space=vmem, size = 0x28000, scoped, tag = 'input window, operand 1, single buffered']
    #allocation6 [shape = 's32[1]{0}', space=sflag, size = 0x4, scoped, tag = 'scoped memory for tpu_custom_call.1']
    #allocation7 [shape = 'u8[131072]{0}', space=vmem, size = 0x20000, scoped, tag = 'input window, operand 3, single buffered']
    #allocation8 [shape = 'u8[16384]{0}', space=vmem, size = 0x4000, scoped, tag = 'output window, operand 0']
    %10 = vsyncpa [#allocation3], 0
    %s11 = scalar_lea.sflag [#allocation3], 1
    %12 = vsyncpa %s11, 0
    %13 = vsyncpa [#allocation6], 0
    %14 = vsyncpa [#allocation4], 0
    %s15 = scalar_lea.sflag [#allocation4], 1
    %16 = vsyncpa %s15, 0
    loop: start=0, step=1, limit=6
    $region2: #{tpu_custom_call.1} parent=1 // loop_pre_header
      _
    $region3: #{tpu_custom_call.1} parent=1 // loop_header
      %s18 = sphi 0, %s22
      %p19 = scmp.ge.s32.totalorder %s18, 6
      %s28 = sphi 0, %s30
      %s31 = sphi 0, %s28
      %s32 = sphi 0, %s31
      %s48 = sphi 0, %s32
      %s52 = sphi 0, %s52
      %s54 = sphi 0, %s52
      %s55 = sphi 0, %s54
      %s69 = sphi 0, %s55
      %s73 = sphi 0, %s73
      %s75 = sphi 0, %s73
      %s76 = sphi 0, %s75
      %s90 = sphi 0, %s76
      %s94 = sphi 0, %s94
      %s96 = sphi 0, %s94
      %s97 = sphi 0, %s96
      %s111 = sphi 0, %s97
      %s115 = sphi 0, %s115
      %s117 = sphi 0, %s115
      %s118 = sphi 0, %s117
      %s132 = sphi 0, %s118
      %s138 = sphi 0, %s140
      %s141 = sphi 0, %s138
      %s142 = sphi 0, %s141
      %s158 = sphi 0, %s142
    $region4: #{tpu_custom_call.1} parent=1 // loop_header_branch
      %21 = sbr.rel (%p19) target = $region8
    $region5: #{tpu_custom_call.1} parent=1 // loop_body
      %s23 = ssub.s32 %s18, 1
      %s24 = ssub.s32 %s18, 2
      %s25 = sadd.s32 %s18, 1
      %s26 = ssub.s32 %s18, %s25
      %p27 = scmp.eq.s32.totalorder %s26, 0
      %s29 = sadd.s32 %s28, 1
      %s30 = scalar_select %p27, %s28, %s29
      %p33 = pneg %p27
      %p34 = scmp.eq.s32.totalorder %s18, 3
      %p35 = por %p33, %p34
      %p36 = scmp.ne.s32.totalorder %s28, %s31
      %p37 = scmp.eq.s32.totalorder %s18, 0
      %p38 = por %p36, %p37
      %p39 = scmp.ne.s32.totalorder %s28, %s31
      %p40 = scmp.eq.s32.totalorder %s23, 3
      %p41 = por %p39, %p40
      %p42 = scmp.ne.s32.totalorder %s31, %s32
      %p43 = scmp.eq.s32.totalorder %s23, 0
      %p44 = por %p42, %p43
      %p45 = scmp.ne.s32.totalorder %s31, %s32
      %p46 = scmp.eq.s32.totalorder %s24, 3
      %p47 = por %p45, %p46
      %p49 = scmp.ne.s32.totalorder %s32, %s48
      %p50 = scmp.eq.s32.totalorder %s24, 0
      %p51 = por %p49, %p50
      %s53 = sadd.s32 %s52, 1
      %p56 = scmp.eq.s32.totalorder %s18, 3
      %p57 = scmp.ne.s32.totalorder %s52, %s54
      %p58 = scmp.eq.s32.totalorder %s18, 0
      %p59 = por %p57, %p58
      %p60 = scmp.ne.s32.totalorder %s52, %s54
      %p61 = scmp.eq.s32.totalorder %s23, 3
      %p62 = por %p60, %p61
      %p63 = scmp.ne.s32.totalorder %s54, %s55
      %p64 = scmp.eq.s32.totalorder %s23, 0
      %p65 = por %p63, %p64
      %p66 = scmp.ne.s32.totalorder %s54, %s55
      %p67 = scmp.eq.s32.totalorder %s24, 3
      %p68 = por %p66, %p67
      %p70 = scmp.ne.s32.totalorder %s55, %s69
      %p71 = scmp.eq.s32.totalorder %s24, 0
      %p72 = por %p70, %p71
      %s74 = sadd.s32 %s73, 1
      %p77 = scmp.eq.s32.totalorder %s18, 3
      %p78 = scmp.ne.s32.totalorder %s73, %s75
      %p79 = scmp.eq.s32.totalorder %s18, 0
      %p80 = por %p78, %p79
      %p81 = scmp.ne.s32.totalorder %s73, %s75
      %p82 = scmp.eq.s32.totalorder %s23, 3
      %p83 = por %p81, %p82
      %p84 = scmp.ne.s32.totalorder %s75, %s76
      %p85 = scmp.eq.s32.totalorder %s23, 0
      %p86 = por %p84, %p85
      %p87 = scmp.ne.s32.totalorder %s75, %s76
      %p88 = scmp.eq.s32.totalorder %s24, 3
      %p89 = por %p87, %p88
      %p91 = scmp.ne.s32.totalorder %s76, %s90
      %p92 = scmp.eq.s32.totalorder %s24, 0
      %p93 = por %p91, %p92
      %s95 = sadd.s32 %s94, 1
      %p98 = scmp.eq.s32.totalorder %s18, 3
      %p99 = scmp.ne.s32.totalorder %s94, %s96
      %p100 = scmp.eq.s32.totalorder %s18, 0
      %p101 = por %p99, %p100
      %p102 = scmp.ne.s32.totalorder %s94, %s96
      %p103 = scmp.eq.s32.totalorder %s23, 3
      %p104 = por %p102, %p103
      %p105 = scmp.ne.s32.totalorder %s96, %s97
      %p106 = scmp.eq.s32.totalorder %s23, 0
      %p107 = por %p105, %p106
      %p108 = scmp.ne.s32.totalorder %s96, %s97
      %p109 = scmp.eq.s32.totalorder %s24, 3
      %p110 = por %p108, %p109
      %p112 = scmp.ne.s32.totalorder %s97, %s111
      %p113 = scmp.eq.s32.totalorder %s24, 0
      %p114 = por %p112, %p113
      %s116 = sadd.s32 %s115, 1
      %p119 = scmp.eq.s32.totalorder %s18, 3
      %p120 = scmp.ne.s32.totalorder %s115, %s117
      %p121 = scmp.eq.s32.totalorder %s18, 0
      %p122 = por %p120, %p121
      %p123 = scmp.ne.s32.totalorder %s115, %s117
      %p124 = scmp.eq.s32.totalorder %s23, 3
      %p125 = por %p123, %p124
      %p126 = scmp.ne.s32.totalorder %s117, %s118
      %p127 = scmp.eq.s32.totalorder %s23, 0
      %p128 = por %p126, %p127
      %p129 = scmp.ne.s32.totalorder %s117, %s118
      %p130 = scmp.eq.s32.totalorder %s24, 3
      %p131 = por %p129, %p130
      %p133 = scmp.ne.s32.totalorder %s118, %s132
      %p134 = scmp.eq.s32.totalorder %s24, 0
      %p135 = por %p133, %p134
      %s136 = ssub.s32 %s18, %s25
      %p137 = scmp.eq.s32.totalorder %s136, 0
      %s139 = sadd.s32 %s138, 1
      %s140 = scalar_select %p137, %s138, %s139
      %p143 = pneg %p137
      %p144 = scmp.eq.s32.totalorder %s18, 3
      %p145 = por %p143, %p144
      %p146 = scmp.ne.s32.totalorder %s138, %s141
      %p147 = scmp.eq.s32.totalorder %s18, 0
      %p148 = por %p146, %p147
      %p149 = scmp.ne.s32.totalorder %s138, %s141
      %p150 = scmp.eq.s32.totalorder %s23, 3
      %p151 = por %p149, %p150
      %p152 = scmp.ne.s32.totalorder %s141, %s142
      %p153 = scmp.eq.s32.totalorder %s23, 0
      %p154 = por %p152, %p153
      %p155 = scmp.ne.s32.totalorder %s141, %s142
      %p156 = scmp.eq.s32.totalorder %s24, 3
      %p157 = por %p155, %p156
      %p159 = scmp.ne.s32.totalorder %s142, %s158
      %p160 = scmp.eq.s32.totalorder %s24, 0
      %p161 = por %p159, %p160
      %p162 = scmp.le.s32.totalorder 1, %s18
      %p163 = scmp.lt.s32.totalorder %s18, 5
      %p164 = pnand %p162, %p163
      %p165 = pneg %p164
      // Predicated region
      $region9: #{tpu_custom_call.1} parent=5 // pred_check
        _
      $region10: #{tpu_custom_call.1} parent=5 // pred_check_branch
        %167 = sbr.rel (%p164) target = $region12
      $region11: #{tpu_custom_call.1} parent=5 // pred_region
        %s168 = ssub.s32 %s18, 1
        // Predicated region
        $region13: #{tpu_custom_call.1} parent=11 // pred_check
          %p169 = pneg %p65
        $region14: #{tpu_custom_call.1} parent=11 // pred_check_branch
          %171 = sbr.rel (%p169) target = $region16
        $region15: #{tpu_custom_call.1} parent=11 // pred_region
          %s173 = ssub.s32 5120, 5120
          %174 = vsyncadd [#allocation6], %s173
          %s175 = sshll.u32 [#allocation5], 4
          %s176 = int_to_ptr.vmem [resolvable:$true] %s175
          %181 = dma.hbm_to_vmem [thread:$0]  %s1, 5120, %s176, [#allocation6], 256, 256, 16
        $region16: #{tpu_custom_call.1} parent=11 // pred_fallthru
          _
        // Predicated region
        $region17: #{tpu_custom_call.1} parent=11 // pred_check
          %p182 = pneg %p86
        $region18: #{tpu_custom_call.1} parent=11 // pred_check_branch
          %184 = sbr.rel (%p182) target = $region20
        $region19: #{tpu_custom_call.1} parent=11 // pred_region
          _
        $region20: #{tpu_custom_call.1} parent=11 // pred_fallthru
          _
        // Predicated region
        $region21: #{tpu_custom_call.1} parent=11 // pred_check
          %p185 = pneg %p107
        $region22: #{tpu_custom_call.1} parent=11 // pred_check_branch
          %187 = sbr.rel (%p185) target = $region24
        $region23: #{tpu_custom_call.1} parent=11 // pred_region
          %s189 = ssub.s32 4096, 4096
          %190 = vsyncadd [#allocation6], %s189
          %s191 = sshll.u32 [#allocation7], 4
          %s192 = int_to_ptr.vmem [resolvable:$true] %s191
          %197 = dma.hbm_to_vmem [thread:$0]  %s3, 4096, %s192, [#allocation6], 128, 128, 8
        $region24: #{tpu_custom_call.1} parent=11 // pred_fallthru
          _
        // Predicated region
        $region25: #{tpu_custom_call.1} parent=11 // pred_check
          %p198 = pneg %p128
        $region26: #{tpu_custom_call.1} parent=11 // pred_check_branch
          %200 = sbr.rel (%p198) target = $region28
        $region27: #{tpu_custom_call.1} parent=11 // pred_region
          _
        $region28: #{tpu_custom_call.1} parent=11 // pred_fallthru
          _
      $region12: #{tpu_custom_call.1} parent=5 // pred_fallthru
        _
      %p201 = scmp.lt.s32.totalorder %s18, 4
      // Predicated region
      $region29: #{tpu_custom_call.1} parent=5 // pred_check
        %p202 = pneg %p201
      $region30: #{tpu_custom_call.1} parent=5 // pred_check_branch
        %204 = sbr.rel (%p202) target = $region32
      $region31: #{tpu_custom_call.1} parent=5 // pred_region
        // Predicated region
        $region33: #{tpu_custom_call.1} parent=31 // pred_check
          %p205 = pneg %p38
        $region34: #{tpu_custom_call.1} parent=31 // pred_check_branch
          %207 = sbr.rel (%p205) target = $region36
        $region35: #{tpu_custom_call.1} parent=31 // pred_region
          %s208 = sand.u32 %s28, 1
          %s209 = scalar_lea.sflag [#allocation3], %s208
          %s210 = sand.u32 %s28, 1
          %s211 = smul.addr %s210, 32
          %s212 = scalar_lea.vmem [#allocation2], %s211
          %s213 = smul.u32 2, %s18
          %s215 = ssub.s32 512, 512
          %216 = vsyncadd %s209, %s215
          %s217 = smul.addr %s213, 2
          %s218 = smul.addr %s217, 128
          %s219 = scalar_lea.hbm %s0, %s218
          %s220 = sshll.u32 %s212, 4
          %s221 = int_to_ptr.vmem [resolvable:$true] %s220
          %226 = dma.hbm_to_vmem [thread:$0]  %s219, 512, %s221, %s209, 256, 256, 16
        $region36: #{tpu_custom_call.1} parent=31 // pred_fallthru
          _
      $region32: #{tpu_custom_call.1} parent=5 // pred_fallthru
        _
      %p227 = scmp.le.s32.totalorder 1, %s18
      %p228 = scmp.lt.s32.totalorder %s18, 5
      %p229 = pnand %p227, %p228
      %p230 = pneg %p229
      // Predicated region
      $region37: #{tpu_custom_call.1} parent=5 // pred_check
        _
      $region38: #{tpu_custom_call.1} parent=5 // pred_check_branch
        %232 = sbr.rel (%p229) target = $region40
      $region39: #{tpu_custom_call.1} parent=5 // pred_region
        %s233 = ssub.s32 %s18, 1
        %s234 = sand.u32 %s31, 1
        %s235 = scalar_lea.sflag [#allocation3], %s234
        %s236 = sand.u32 %s31, 1
        %s237 = smul.addr %s236, 32
        %s238 = scalar_lea.vmem [#allocation2], %s237
        // Predicated region
        $region41: #{tpu_custom_call.1} parent=39 // pred_check
          %p239 = pneg %p44
        $region42: #{tpu_custom_call.1} parent=39 // pred_check_branch
          %241 = sbr.rel (%p239) target = $region44
        $region43: #{tpu_custom_call.1} parent=39 // pred_region
          %242 = dma.done %s235, 512
        $region44: #{tpu_custom_call.1} parent=39 // pred_fallthru
          _
        // Predicated region
        $region45: #{tpu_custom_call.1} parent=39 // pred_check
          %p243 = pneg %p65
        $region46: #{tpu_custom_call.1} parent=39 // pred_check_branch
          %245 = sbr.rel (%p243) target = $region48
        $region47: #{tpu_custom_call.1} parent=39 // pred_region
          %246 = dma.done [#allocation6], 5120
        $region48: #{tpu_custom_call.1} parent=39 // pred_fallthru
          _
        // Predicated region
        $region49: #{tpu_custom_call.1} parent=39 // pred_check
          %p247 = pneg %p107
        $region50: #{tpu_custom_call.1} parent=39 // pred_check_branch
          %249 = sbr.rel (%p247) target = $region52
        $region51: #{tpu_custom_call.1} parent=39 // pred_region
          %250 = dma.done [#allocation6], 4096
        $region52: #{tpu_custom_call.1} parent=39 // pred_fallthru
          _
        %s251 = sand.u32 %s31, 1
        %s252 = scalar_lea.sflag [#allocation3], %s251
        %s253 = sand.u32 %s31, 1
        %s254 = smul.addr %s253, 32
        %s255 = scalar_lea.vmem [#allocation2], %s254
        %p256 = pneg %p44
        %p257 = pneg %p41
        %p258 = pneg %p65
        %p259 = pneg %p62
        %p260 = pneg %p86
        %p261 = pneg %p83
        %p262 = pneg %p107
        %p263 = pneg %p104
        %p264 = pneg %p128
        %p265 = pneg %p125
        %p266 = pneg %p154
        %p267 = pneg %p151
        %s268 = sand.u32 %s141, 1
        %s269 = scalar_lea.sflag [#allocation4], %s268
        %s270 = sand.u32 %s141, 1
        %s271 = smul.addr %s270, 16
        %s272 = scalar_lea.vmem [#allocation8], %s271
        %s273 = smul.u32 2, %s23
        %s274 = smul.u32 2, %s23
        %v275 = vld [vmem:[%s238] sm:$0xff]
        %v276 = vld [vmem:[%s238 + $0x8] sm:$0xff]
        %v277 = vld [vmem:[%s238 + $0x10] sm:$0xff]
        %v278 = vld [vmem:[%s238 + $0x18] sm:$0xff]
        %v279 = vld [vmem:[#allocation5] sm:$0xff]
        %v280 = vld [vmem:[#allocation5 + $0x8] sm:$0xff]
        %v281 = vld [vmem:[#allocation5 + $0x10] sm:$0xff]
        %v282 = vld [vmem:[#allocation5 + $0x18] sm:$0xff]
        %v283 = vld [vmem:[#allocation5 + $0x20] sm:$0xff]
        %v284 = vld [vmem:[#allocation5 + $0x28] sm:$0xff]
        %v285 = vld [vmem:[#allocation5 + $0x30] sm:$0xff]
        %v286 = vld [vmem:[#allocation5 + $0x38] sm:$0xff]
        %v287 = vld [vmem:[#allocation5 + $0x40] sm:$0xff]
        %v288 = vld [vmem:[#allocation5 + $0x48] sm:$0xff]
        %v289 = vld [vmem:[#allocation5 + $0x50] sm:$0xff]
        %v290 = vld [vmem:[#allocation5 + $0x58] sm:$0xff]
        %v291 = vld [vmem:[#allocation5 + $0x60] sm:$0xff]
        %v292 = vld [vmem:[#allocation5 + $0x68] sm:$0xff]
        %v293 = vld [vmem:[#allocation5 + $0x70] sm:$0xff]
        %v294 = vld [vmem:[#allocation5 + $0x78] sm:$0xff]
        %v295 = vld [vmem:[#allocation5 + $0x80] sm:$0xff]
        %v296 = vld [vmem:[#allocation5 + $0x88] sm:$0xff]
        %v297 = vld [vmem:[#allocation5 + $0x90] sm:$0xff]
        %v298 = vld [vmem:[#allocation5 + $0x98] sm:$0xff]
        %v299 = vld [vmem:[#allocation5 + $0xa0] sm:$0xff]
        %v300 = vld [vmem:[#allocation5 + $0xa8] sm:$0xff]
        %v301 = vld [vmem:[#allocation5 + $0xb0] sm:$0xff]
        %v302 = vld [vmem:[#allocation5 + $0xb8] sm:$0xff]
        %v303 = vld [vmem:[#allocation5 + $0xc0] sm:$0xff]
        %v304 = vld [vmem:[#allocation5 + $0xc8] sm:$0xff]
        %v305 = vld [vmem:[#allocation5 + $0xd0] sm:$0xff]
        %v306 = vld [vmem:[#allocation5 + $0xd8] sm:$0xff]
        %v307 = vld [vmem:[#allocation5 + $0xe0] sm:$0xff]
        %v308 = vld [vmem:[#allocation5 + $0xe8] sm:$0xff]
        %v309 = vld [vmem:[#allocation5 + $0xf0] sm:$0xff]
        %v310 = vld [vmem:[#allocation5 + $0xf8] sm:$0xff]
        %v311 = vld [vmem:[#allocation5 + $0x100] sm:$0xff]
        %v312 = vld [vmem:[#allocation5 + $0x108] sm:$0xff]
        %v313 = vld [vmem:[#allocation5 + $0x110] sm:$0xff]
        %v314 = vld [vmem:[#allocation5 + $0x118] sm:$0xff]
        %v315 = vld [vmem:[#allocation5 + $0x120] sm:$0xff]
        %v316 = vld [vmem:[#allocation5 + $0x128] sm:$0xff]
        %v317 = vld [vmem:[#allocation5 + $0x130] sm:$0xff]
        %v318 = vld [vmem:[#allocation5 + $0x138] sm:$0xff]
        %v319 = vld [vmem:[%s2] sm:$0x3]
        %v321 = vlaneseq
        %v322 = vshrl.u32 %v321, 7
        %v323 = vsub.s32 0, %v322
        %v324 = vrot.slane %v319, %v323
        %v325 = vlaneseq
        %v326 = vshrl.u32 %v325, 7
        %v327 = vsub.s32 1, %v326
        %v328 = vrot.slane %v319, %v327
        %vm331 = vcmask 261120
        %v333 = vsel %vm331, %v276, 0
        %v336 = vsel %vm331, %v278, 0
        %338 = vmatprep.subr.mxu0 %v280
        %339 = vmatpush1.msra.mxu0 %v279
        %340 = vmatprep.subr.mxu0 %v282
        %341 = vmatpush1.msra.mxu0 %v281
        %342 = vmatprep.subr.mxu0 %v284
        %343 = vmatpush1.msra.mxu0 %v283
        %344 = vmatprep.subr.mxu0 %v286
        %345 = vmatpush1.msra.mxu0 %v285
        %346 = vmatprep.subr.mxu0 %v288
        %347 = vmatpush1.msra.mxu0 %v287
        %348 = vmatprep.subr.mxu0 %v290
        %349 = vmatpush1.msra.mxu0 %v289
        %350 = vmatprep.subr.mxu0 %v292
        %351 = vmatpush1.msra.mxu0 %v291
        %352 = vmatprep.subr.mxu0 %v294
        %353 = vmatpush1.msra.mxu0 %v293
        %354 = vmatprep.subr.mxu0 %v296
        %355 = vmatpush1.msra.mxu0 %v295
        %356 = vmatprep.subr.mxu0 %v298
        %357 = vmatpush1.msra.mxu0 %v297
        %358 = vmatprep.subr.mxu0 %v300
        %359 = vmatpush1.msra.mxu0 %v299
        %360 = vmatprep.subr.mxu0 %v302
        %361 = vmatpush1.msra.mxu0 %v301
        %362 = vmatprep.subr.mxu0 %v304
        %363 = vmatpush1.msra.mxu0 %v303
        %364 = vmatprep.subr.mxu0 %v306
        %365 = vmatpush1.msra.mxu0 %v305
        %366 = vmatprep.subr.mxu0 %v308
        %367 = vmatpush1.msra.mxu0 %v307
        %368 = vmatprep.subr.mxu0 %v310
        %369 = vmatpush1.msra.mxu0 %v309
        %370 = vmatprep.subr.mxu0 %v312
        %371 = vmatpush1.msra.mxu0 %v311
        %372 = vmatprep.subr.mxu0 %v314
        %373 = vmatpush1.msra.mxu0 %v313
        %374 = vmatprep.subr.mxu0 %v316
        %375 = vmatpush1.msra.mxu0 %v315
        %376 = vmatprep.subr.mxu0 %v318
        %377 = vmatpush1.msra.mxu0 %v317
        %378 = vmatprep.subr.mxu0 0.0
        %379 = vmatpush1.msra.mxu0 0.0
        %380 = vmatprep.subr.mxu0 0.0
        %381 = vmatpush1.msra.mxu0 0.0
        %382 = vmatprep.subr.mxu0 0.0
        %383 = vmatpush1.msra.mxu0 0.0
        %384 = vmatprep.subr.mxu0 0.0
        %385 = vmatpush1.msra.mxu0 0.0
        %386 = vmatprep.subr.mxu0 0.0
        %387 = vmatpush1.msra.mxu0 0.0
        %388 = vmatprep.subr.mxu0 0.0
        %389 = vmatpush1.msra.mxu0 0.0
        %390 = vmatprep.subr.mxu0 0.0
        %391 = vmatpush1.msra.mxu0 0.0
        %392 = vmatprep.subr.mxu0 0.0
        %393 = vmatpush1.msra.mxu0 0.0
        %394 = vmatprep.subr.mxu0 0.0
        %395 = vmatpush1.msra.mxu0 0.0
        %396 = vmatprep.subr.mxu0 0.0
        %397 = vmatpush1.msra.mxu0 0.0
        %398 = vmatprep.subr.mxu0 0.0
        %399 = vmatpush1.msra.mxu0 0.0
        %400 = vmatprep.subr.mxu0 0.0
        %401 = vmatpush1.msra.mxu0 0.0
        %402 = vmatprep.mubr.f32.mxu0 %v333
        %403 = vmatmul.mubr.f32.gmra.mrb[0].mxu0 %v275
        %v404 = vpop.f32.mrb[0].mxu0
        %v405 = vadd.f32 %v324, %v404
        %v406 = vpop.f32.mrb[0].mxu0
        %v407 = vadd.f32 %v328, %v406
        %408 = vmatprep.mubr.f32.mxu0 %v336
        %409 = vmatmul.mubr.f32.gmra.mrb[0].mxu0 %v277
        %v410 = vpop.f32.mrb[0].mxu0
        %v411 = vadd.f32 %v324, %v410
        %v412 = vpop.f32.mrb[0].mxu0
        %v413 = vadd.f32 %v328, %v412
        %414 = vdwg.mxu0
        %v415 = vmax.f32 %v405, 0.0
        %v416 = vmax.f32 %v407, 0.0
        %v417 = vmax.f32 %v411, 0.0
        %v418 = vmax.f32 %v413, 0.0
        %v419 = vld [vmem:[#allocation7] sm:$0xff]
        %v420 = vld [vmem:[#allocation7 + $0x8] sm:$0xff]
        %v421 = vld [vmem:[#allocation7 + $0x10] sm:$0xff]
        %v422 = vld [vmem:[#allocation7 + $0x18] sm:$0xff]
        %v423 = vld [vmem:[#allocation7 + $0x20] sm:$0xff]
        %v424 = vld [vmem:[#allocation7 + $0x28] sm:$0xff]
        %v425 = vld [vmem:[#allocation7 + $0x30] sm:$0xff]
        %v426 = vld [vmem:[#allocation7 + $0x38] sm:$0xff]
        %v427 = vld [vmem:[#allocation7 + $0x40] sm:$0xff]
        %v428 = vld [vmem:[#allocation7 + $0x48] sm:$0xff]
        %v429 = vld [vmem:[#allocation7 + $0x50] sm:$0xff]
        %v430 = vld [vmem:[#allocation7 + $0x58] sm:$0xff]
        %v431 = vld [vmem:[#allocation7 + $0x60] sm:$0xff]
        %v432 = vld [vmem:[#allocation7 + $0x68] sm:$0xff]
        %v433 = vld [vmem:[#allocation7 + $0x70] sm:$0xff]
        %v434 = vld [vmem:[#allocation7 + $0x78] sm:$0xff]
        %v435 = vld [vmem:[#allocation7 + $0x80] sm:$0xff]
        %v436 = vld [vmem:[#allocation7 + $0x88] sm:$0xff]
        %v437 = vld [vmem:[#allocation7 + $0x90] sm:$0xff]
        %v438 = vld [vmem:[#allocation7 + $0x98] sm:$0xff]
        %v439 = vld [vmem:[#allocation7 + $0xa0] sm:$0xff]
        %v440 = vld [vmem:[#allocation7 + $0xa8] sm:$0xff]
        %v441 = vld [vmem:[#allocation7 + $0xb0] sm:$0xff]
        %v442 = vld [vmem:[#allocation7 + $0xb8] sm:$0xff]
        %v443 = vld [vmem:[#allocation7 + $0xc0] sm:$0xff]
        %v444 = vld [vmem:[#allocation7 + $0xc8] sm:$0xff]
        %v445 = vld [vmem:[#allocation7 + $0xd0] sm:$0xff]
        %v446 = vld [vmem:[#allocation7 + $0xd8] sm:$0xff]
        %v447 = vld [vmem:[#allocation7 + $0xe0] sm:$0xff]
        %v448 = vld [vmem:[#allocation7 + $0xe8] sm:$0xff]
        %v449 = vld [vmem:[#allocation7 + $0xf0] sm:$0xff]
        %v450 = vld [vmem:[#allocation7 + $0xf8] sm:$0xff]
        %v451 = vld [vmem:[%s4] sm:$0x1]
        %v453 = vlaneseq
        %v454 = vshrl.u32 %v453, 7
        %v455 = vsub.s32 0, %v454
        %v456 = vrot.slane %v451, %v455
        %458 = vmatprep.subr.mxu0 0.0
        %459 = vmatpush1.msra.mxu0 %v419
        %460 = vmatprep.subr.mxu0 0.0
        %461 = vmatpush1.msra.mxu0 %v420
        %462 = vmatprep.subr.mxu0 0.0
        %463 = vmatpush1.msra.mxu0 %v421
        %464 = vmatprep.subr.mxu0 0.0
        %465 = vmatpush1.msra.mxu0 %v422
        %466 = vmatprep.subr.mxu0 0.0
        %467 = vmatpush1.msra.mxu0 %v423
        %468 = vmatprep.subr.mxu0 0.0
        %469 = vmatpush1.msra.mxu0 %v424
        %470 = vmatprep.subr.mxu0 0.0
        %471 = vmatpush1.msra.mxu0 %v425
        %472 = vmatprep.subr.mxu0 0.0
        %473 = vmatpush1.msra.mxu0 %v426
        %474 = vmatprep.subr.mxu0 0.0
        %475 = vmatpush1.msra.mxu0 %v427
        %476 = vmatprep.subr.mxu0 0.0
        %477 = vmatpush1.msra.mxu0 %v428
        %478 = vmatprep.subr.mxu0 0.0
        %479 = vmatpush1.msra.mxu0 %v429
        %480 = vmatprep.subr.mxu0 0.0
        %481 = vmatpush1.msra.mxu0 %v430
        %482 = vmatprep.subr.mxu0 0.0
        %483 = vmatpush1.msra.mxu0 %v431
        %484 = vmatprep.subr.mxu0 0.0
        %485 = vmatpush1.msra.mxu0 %v432
        %486 = vmatprep.subr.mxu0 0.0
        %487 = vmatpush1.msra.mxu0 %v433
        %488 = vmatprep.subr.mxu0 0.0
        %489 = vmatpush1.msra.mxu0 %v434
        %490 = vmatprep.subr.mxu0 0.0
        %491 = vmatpush1.msra.mxu0 %v435
        %492 = vmatprep.subr.mxu0 0.0
        %493 = vmatpush1.msra.mxu0 %v436
        %494 = vmatprep.subr.mxu0 0.0
        %495 = vmatpush1.msra.mxu0 %v437
        %496 = vmatprep.subr.mxu0 0.0
        %497 = vmatpush1.msra.mxu0 %v438
        %498 = vmatprep.subr.mxu0 0.0
        %499 = vmatpush1.msra.mxu0 %v439
        %500 = vmatprep.subr.mxu0 0.0
        %501 = vmatpush1.msra.mxu0 %v440
        %502 = vmatprep.subr.mxu0 0.0
        %503 = vmatpush1.msra.mxu0 %v441
        %504 = vmatprep.subr.mxu0 0.0
        %505 = vmatpush1.msra.mxu0 %v442
        %506 = vmatprep.subr.mxu0 0.0
        %507 = vmatpush1.msra.mxu0 %v443
        %508 = vmatprep.subr.mxu0 0.0
        %509 = vmatpush1.msra.mxu0 %v444
        %510 = vmatprep.subr.mxu0 0.0
        %511 = vmatpush1.msra.mxu0 %v445
        %512 = vmatprep.subr.mxu0 0.0
        %513 = vmatpush1.msra.mxu0 %v446
        %514 = vmatprep.subr.mxu0 0.0
        %515 = vmatpush1.msra.mxu0 %v447
        %516 = vmatprep.subr.mxu0 0.0
        %517 = vmatpush1.msra.mxu0 %v448
        %518 = vmatprep.subr.mxu0 0.0
        %519 = vmatpush1.msra.mxu0 %v449
        %520 = vmatprep.subr.mxu0 0.0
        %521 = vmatpush1.msra.mxu0 %v450
        %522 = vmatprep.mubr.f32.mxu0 %v416
        %523 = vmatmul.mubr.f32.gmra.mrb[0].mxu0 %v415
        %v524 = vpop.f32.mrb[0].mxu0
        %v525 = vadd.f32 %v456, %v524
        %v526 = vpop.f32.mrb[0].mxu0
        %527 = vmatprep.mubr.f32.mxu0 %v418
        %528 = vmatmul.mubr.f32.gmra.mrb[0].mxu0 %v417
        %v529 = vpop.f32.mrb[0].mxu0
        %v530 = vadd.f32 %v456, %v529
        %v531 = vpop.f32.mrb[0].mxu0
        %532 = vdwg.mxu0
        %v533 = vmax.f32 %v525, 0.0
        %v534 = vmax.f32 %v530, 0.0
        %535 = vst [vmem:[%s272] sm:$0xff] %v533
        %536 = vst [vmem:[%s272 + $0x8] sm:$0xff] %v534
        %s537 = sand.u32 %s141, 1
        %s538 = scalar_lea.sflag [#allocation4], %s537
        %s539 = sand.u32 %s141, 1
        %s540 = smul.addr %s539, 16
        %s541 = scalar_lea.vmem [#allocation8], %s540
        // Predicated region
        $region53: #{tpu_custom_call.1} parent=39 // pred_check
          %p542 = pneg %p151
        $region54: #{tpu_custom_call.1} parent=39 // pred_check_branch
          %544 = sbr.rel (%p542) target = $region56
        $region55: #{tpu_custom_call.1} parent=39 // pred_region
          %s545 = smul.u32 2, %s23
          %s547 = ssub.s32 256, 256
          %548 = vsyncadd %s538, %s547
          %s549 = smul.addr %s545, 128
          %s550 = scalar_lea.hbm %s5, %s549
          %s551 = sshll.u32 %s541, 4
          %s552 = int_to_ptr.vmem [resolvable:$true] %s551
          %557 = dma.vmem_to_hbm [thread:$0]  %s552, 256, %s550, %s538, 128, 128, 8
        $region56: #{tpu_custom_call.1} parent=39 // pred_fallthru
          _
      $region40: #{tpu_custom_call.1} parent=5 // pred_fallthru
        _
      %p558 = scmp.le.s32.totalorder 2, %s18
      // Predicated region
      $region57: #{tpu_custom_call.1} parent=5 // pred_check
        %p559 = pneg %p558
      $region58: #{tpu_custom_call.1} parent=5 // pred_check_branch
        %561 = sbr.rel (%p559) target = $region60
      $region59: #{tpu_custom_call.1} parent=5 // pred_region
        %s562 = ssub.s32 %s18, 2
        // Predicated region
        $region61: #{tpu_custom_call.1} parent=59 // pred_check
          %p563 = pneg %p157
        $region62: #{tpu_custom_call.1} parent=59 // pred_check_branch
          %565 = sbr.rel (%p563) target = $region64
        $region63: #{tpu_custom_call.1} parent=59 // pred_region
          %s566 = sand.u32 %s142, 1
          %s567 = scalar_lea.sflag [#allocation4], %s566
          %s568 = sand.u32 %s142, 1
          %s569 = smul.addr %s568, 16
          %s570 = scalar_lea.vmem [#allocation8], %s569
          %571 = dma.done %s567, 256
        $region64: #{tpu_custom_call.1} parent=59 // pred_fallthru
          _
      $region60: #{tpu_custom_call.1} parent=5 // pred_fallthru
        _
    $region6: #{tpu_custom_call.1} parent=1 // loop_footer
      %s22 = sadd.s32 1, %s18
    $region7: #{tpu_custom_call.1} parent=1 // loop_footer_branch
      %17 = sbr.rel target = $region3
    $region8: #{tpu_custom_call.1} parent=1 // loop_exit
      _
    %572 = vsyncpa [#allocation3], 1
    %s573 = scalar_lea.sflag [#allocation3], 1
    %574 = vsyncpa %s573, 1
    %575 = vsyncpa [#allocation6], 1
    %576 = vsyncpa [#allocation4], 1
    %s577 = scalar_lea.sflag [#allocation4], 1
    %578 = vsyncpa %s577, 1

</llo_original>
